<compile_context>
chip_gen: v7x
topology: tpu7x:2x2x1
jax: 0.10.0
libtpu: 0.0.40
codegen_flags: <defaults>
</compile_context>

<pallas_src>
import functools

import jax
import jax.numpy as jnp
from jax.experimental import pallas as pl
from jax.experimental.pallas import tpu as pltpu

OUT_LANES = 128  # lane-dense output width -> unmasked vst; wrapper slices cols


def _audio_classifier_kernel(x_ref, w1_ref, b1_ref, wcat_ref, bpad_ref,
                             out_ref, *, gb, n, n_classes):
    # x_ref: (GB*N, F) -- one grid step handles GB independent softmax groups.
    x = x_ref[...]
    w1 = w1_ref[...]
    wcat = wcat_ref[...]

    # fc1 + bias + relu (accumulate and do bias/relu in f32 -> v5e-safe)
    h = jnp.dot(x, w1, preferred_element_type=jnp.float32) + b1_ref[...]
    h = jnp.maximum(h, 0.0)                                   # (GB*N, H) f32

    # Single fused MXU pass: cols [0:n_classes] = h@w2, col n_classes = h@wa.
    hm = h.astype(wcat.dtype)                                 # no-op in f32 path
    fused = jnp.dot(hm, wcat, preferred_element_type=jnp.float32)  # (GB*N, 128)

    # Attention logits.  The attention bias `ba` is intentionally dropped:
    # softmax(z + c) == softmax(z), so it cancels exactly.
    logits = fused[:, n_classes:n_classes + 1].reshape(gb, n, 1)

    # Segmented softmax over the batch axis of each group (== torch dim=0).
    m = jnp.max(logits, axis=1, keepdims=True)                # (GB, 1, 1)
    e = jnp.exp(logits - m)                                   # (GB, N, 1)
    denom = jnp.sum(e, axis=1, keepdims=True)                 # (GB, 1, 1)
    attn = (e * pl.reciprocal(denom, approx=False)).reshape(gb * n, 1)

    # attn * (h @ w2) == (attn * h) @ w2 ; bpad is zero outside the fc2 cols.
    out_ref[...] = (attn * fused + bpad_ref[...]).astype(out_ref.dtype)


def pack_params(w1, b1, wa, ba, w2, b2, *, use_bf16=False):
    """One-time packing of weights for the fused kernel.

    Returns ((w1, b1, wcat, bpad), n_classes).  `ba` is unused because it
    cancels inside the per-group softmax.
    """
    H = w1.shape[1]
    n_classes = w2.shape[1]
    assert n_classes < OUT_LANES, "n_classes must be < 128 (wa packing slot)"

    wcat = jnp.zeros((H, OUT_LANES), jnp.float32)
    wcat = wcat.at[:, :n_classes].set(jnp.asarray(w2, jnp.float32))
    wcat = wcat.at[:, n_classes:n_classes + 1].set(jnp.asarray(wa, jnp.float32))
    bpad = jnp.zeros((1, OUT_LANES), jnp.float32)
    bpad = bpad.at[:, :n_classes].set(jnp.asarray(b2, jnp.float32).reshape(1, -1))

    w1 = jnp.asarray(w1, jnp.float32)
    b1 = jnp.asarray(b1, jnp.float32).reshape(1, -1)
    if use_bf16:                      # cast once here, never inside the kernel
        w1 = w1.astype(jnp.bfloat16)
        wcat = wcat.astype(jnp.bfloat16)
    del ba
    return (w1, b1, wcat, bpad), n_classes


@functools.partial(jax.jit, static_argnames=("n_classes",))
def _forward(x, w1, b1, wcat, bpad, *, n_classes):
    squeeze = (x.ndim == 2)
    if squeeze:
        x = x[None]
    G, N, F = x.shape
    H = w1.shape[1]

    x = x.astype(jnp.bfloat16 if w1.dtype == jnp.bfloat16 else jnp.float32)

    # ---- pick the group-blocking factor GB (rows per grid step) ----
    target_rows = 256                              # fills v6e/v7x MXU; 2x v5e M
    gb = max(1, min(G, -(-target_rows // N)))
    if G >= 2:                                     # keep >= 2 steps for v7x megacore
        gb = min(gb, -(-G // 2))
    while gb > 1 and (gb * N) % 8 != 0:            # keep block rows sublane-aligned
        gb -= 1
    # TODO(synk): for N not a multiple of 8 with many groups, a masked softmax
    # (instead of the gb-shrink above) would keep blocks large.

    n_blocks = -(-G // gb)
    g_pad = n_blocks * gb
    rows = g_pad * N
    blk = gb * N

    xf = x.reshape(G * N, F)
    if g_pad != G:
        # Dummy all-zero groups: each group's softmax is independent, so the
        # padding cannot pollute real groups; padded rows are sliced off below.
        xf = jnp.pad(xf, ((0, (g_pad - G) * N), (0, 0)))

    kernel = functools.partial(_audio_classifier_kernel,
                               gb=gb, n=N, n_classes=n_classes)

    out = pl.pallas_call(
        kernel,
        out_shape=jax.ShapeDtypeStruct((rows, OUT_LANES), jnp.float32),
        grid=(n_blocks,),
        in_specs=[
            pl.BlockSpec((blk, F), lambda i: (i, 0)),          # x rows (GB groups)
            pl.BlockSpec((F, H), lambda i: (0, 0)),            # w1 (resident)
            pl.BlockSpec((1, H), lambda i: (0, 0)),            # b1
            pl.BlockSpec((H, OUT_LANES), lambda i: (0, 0)),    # [w2 | wa | 0]
            pl.BlockSpec((1, OUT_LANES), lambda i: (0, 0)),    # zero-padded b2
        ],
        out_specs=pl.BlockSpec((blk, OUT_LANES), lambda i: (i, 0)),
        compiler_params=pltpu.CompilerParams(
            dimension_semantics=("parallel",)),
    )(xf, w1, b1, wcat, bpad)

    out = out[:G * N, :n_classes].reshape(G, N, n_classes)
    if squeeze:
        out = out[0]
    return out


def audio_classifier_forward(x, packed, n_classes):
    """x: (N, F) single group, or (G, N, F) stacked independent groups.
    Softmax runs over the N axis of each group (== torch dim=0 per group)."""
    w1, b1, wcat, bpad = packed
    return _forward(x, w1, b1, wcat, bpad, n_classes=n_classes)


def init_params(key, input_size=13, hidden=128, n_classes=2):
    """Deterministic init mimicking nn.Linear's U(-1/sqrt(fan_in), +).
    Weights stored as (in, out) = PyTorch weight.T."""
    ks = jax.random.split(key, 6)

    def u(k, shape, fan_in):
        bound = 1.0 / jnp.sqrt(fan_in)
        return jax.random.uniform(k, shape, jnp.float32, -bound, bound)

    w1 = u(ks[0], (input_size, hidden), input_size)   # fc1.weight.T
    b1 = u(ks[1], (1, hidden), input_size)            # fc1.bias
    wa = u(ks[2], (hidden, 1), hidden)                # attention.weight.T
    ba = u(ks[3], (1, 1), hidden)                     # attention.bias
    w2 = u(ks[4], (hidden, n_classes), hidden)        # fc2.weight.T
    b2 = u(ks[5], (1, n_classes), hidden)             # fc2.bias
    return w1, b1, wa, ba, w2, b2


def reference_forward(x, w1, b1, wa, ba, w2, b2):
    h = jnp.maximum(x @ w1 + b1, 0.0)
    logits = h @ wa + ba
    attn = jax.nn.softmax(logits, axis=0)
    return (h * attn) @ w2 + b2


if __name__ == "__main__":
    key = jax.random.PRNGKey(0)
    k_x, k_xg, k_x5, k_p = jax.random.split(key, 4)

    N, F = 8, 13                      # batch of 8 feature vectors, 13 MFCC features
    raw = init_params(k_p, input_size=F, hidden=128, n_classes=2)
    packed, n_classes = pack_params(*raw)

    # --- single-group path (matches the original PyTorch forward exactly) ---
    x = jax.random.normal(k_x, (N, F), dtype=jnp.float32)
    out = jax.block_until_ready(audio_classifier_forward(x, packed, n_classes))
    ref = reference_forward(x, *raw)
    assert out.shape == (N, 2)
    assert jnp.allclose(out, ref, atol=1e-5, rtol=1e-5), "single-group mismatch"

    # --- batched groups: G independent softmax groups, group-blocked kernel ---
    G = 16
    xg = jax.random.normal(k_xg, (G, N, F), dtype=jnp.float32)
    outg = jax.block_until_ready(audio_classifier_forward(xg, packed, n_classes))
    refg = jax.vmap(lambda xx: reference_forward(xx, *raw))(xg)
    assert outg.shape == (G, N, 2)
    assert jnp.allclose(outg, refg, atol=1e-5, rtol=1e-5), "batched mismatch"

    # --- G not a multiple of the group block (exercises dummy-group padding) ---
    G5 = 5
    x5 = jax.random.normal(k_x5, (G5, N, F), dtype=jnp.float32)
    out5 = jax.block_until_ready(audio_classifier_forward(x5, packed, n_classes))
    ref5 = jax.vmap(lambda xx: reference_forward(xx, *raw))(x5)
    assert out5.shape == (G5, N, 2)
    assert jnp.allclose(out5, ref5, atol=1e-5, rtol=1e-5), "ragged-G mismatch"

    # --- bf16 MXU-operand path (v6e/v7x lever); K=13 -> looser tolerance ---
    packed_bf16, _ = pack_params(*raw, use_bf16=True)
    outb = jax.block_until_ready(
        audio_classifier_forward(xg, packed_bf16, n_classes))
    assert jnp.allclose(outb, refg, atol=5e-2, rtol=5e-2), "bf16 path diverged"

    print("KERNEL_OK")
</pallas_src>

<mosaic_0001>
module attributes {stable_mosaic.version = 11 : i64} {
  func.func @_audio_classifier_kernel(%arg0: i32, %arg1: memref<8x13xf32, #tpu.memory_space<vmem>>, %arg2: memref<13x128xf32, #tpu.memory_space<vmem>>, %arg3: memref<1x128xf32, #tpu.memory_space<vmem>>, %arg4: memref<128x128xf32, #tpu.memory_space<vmem>>, %arg5: memref<1x128xf32, #tpu.memory_space<vmem>>, %arg6: memref<8x128xf32, #tpu.memory_space<vmem>>) attributes {dimension_semantics = [#tpu.dimension_semantics<parallel>], iteration_bounds = array<i64: 1>, scalar_prefetch = 0 : i64, scratch_operands = 0 : i64, tpu.core_type = #tpu.core_type<tc>, window_params = [{transform_indices = @transform_0, window_bounds = array<i64: 8, 13>}, {pipeline_mode = #tpu.pipeline_mode<synchronous>, transform_indices = @transform_1, window_bounds = array<i64: 13, 128>}, {pipeline_mode = #tpu.pipeline_mode<synchronous>, transform_indices = @transform_2, window_bounds = array<i64: 1, 128>}, {pipeline_mode = #tpu.pipeline_mode<synchronous>, transform_indices = @transform_3, window_bounds = array<i64: 128, 128>}, {pipeline_mode = #tpu.pipeline_mode<synchronous>, transform_indices = @transform_4, window_bounds = array<i64: 1, 128>}, {transform_indices = @transform_5, window_bounds = array<i64: 8, 128>}]} {
    %c0 = arith.constant 0 : index
    %c0_0 = arith.constant 0 : index
    %0 = vector.load %arg1[%c0, %c0_0] : memref<8x13xf32, #tpu.memory_space<vmem>>, vector<8x13xf32>
    %c0_1 = arith.constant 0 : index
    %c0_2 = arith.constant 0 : index
    %1 = vector.load %arg2[%c0_1, %c0_2] : memref<13x128xf32, #tpu.memory_space<vmem>>, vector<13x128xf32>
    %c0_3 = arith.constant 0 : index
    %c0_4 = arith.constant 0 : index
    %2 = vector.load %arg4[%c0_3, %c0_4] : memref<128x128xf32, #tpu.memory_space<vmem>>, vector<128x128xf32>
    %cst = arith.constant dense<0.000000e+00> : vector<8x128xf32>
    %3 = tpu.matmul %0, %1, %cst {dimension_numbers = #tpu.dot_dimension_numbers<[1], [0], [0], [1], [0, 0, 1, 1], [], []>} : vector<8x13xf32>, vector<13x128xf32>, vector<8x128xf32> -> vector<8x128xf32>
    %c0_5 = arith.constant 0 : index
    %c0_6 = arith.constant 0 : index
    %4 = vector.load %arg3[%c0_5, %c0_6] : memref<1x128xf32, #tpu.memory_space<vmem>>, vector<1x128xf32>
    %5 = vector.broadcast %4 : vector<1x128xf32> to vector<8x128xf32>
    %6 = arith.addf %3, %5 : vector<8x128xf32>
    %cst_7 = arith.constant 0.000000e+00 : f32
    %7 = vector.broadcast %cst_7 : f32 to vector<8x128xf32>
    %8 = arith.maximumf %6, %7 : vector<8x128xf32>
    %cst_8 = arith.constant dense<0.000000e+00> : vector<8x128xf32>
    %9 = tpu.matmul %8, %2, %cst_8 {dimension_numbers = #tpu.dot_dimension_numbers<[1], [0], [0], [1], [0, 0, 1, 1], [], []>} : vector<8x128xf32>, vector<128x128xf32>, vector<8x128xf32> -> vector<8x128xf32>
    %10 = vector.extract_strided_slice %9 {offsets = [0, 2], sizes = [8, 1], strides = [1, 1]} : vector<8x128xf32> to vector<8x1xf32>
    %11 = vector.shape_cast %10 : vector<8x1xf32> to vector<1x8x1xf32>
    %cst_9 = arith.constant dense<0xFF800000> : vector<1x1xf32>
    %12 = vector.multi_reduction <maximumf>, %11, %cst_9 [1] : vector<1x8x1xf32> to vector<1x1xf32>
    %13 = vector.shape_cast %12 : vector<1x1xf32> to vector<1x1x1xf32>
    %14 = vector.broadcast %13 : vector<1x1x1xf32> to vector<1x8x1xf32>
    %15 = arith.subf %11, %14 : vector<1x8x1xf32>
    %16 = math.exp %15 : vector<1x8x1xf32>
    %cst_10 = arith.constant dense<0.000000e+00> : vector<1x1xf32>
    %17 = vector.multi_reduction <add>, %16, %cst_10 [1] : vector<1x8x1xf32> to vector<1x1xf32>
    %18 = vector.shape_cast %17 : vector<1x1xf32> to vector<1x1x1xf32>
    %19 = tpu.reciprocal %18 : vector<1x1x1xf32> -> vector<1x1x1xf32>
    %20 = vector.broadcast %19 : vector<1x1x1xf32> to vector<1x8x1xf32>
    %21 = arith.mulf %16, %20 : vector<1x8x1xf32>
    %22 = vector.shape_cast %21 : vector<1x8x1xf32> to vector<8x1xf32>
    %23 = vector.broadcast %22 : vector<8x1xf32> to vector<8x128xf32>
    %24 = arith.mulf %23, %9 : vector<8x128xf32>
    %c0_11 = arith.constant 0 : index
    %c0_12 = arith.constant 0 : index
    %25 = vector.load %arg5[%c0_11, %c0_12] : memref<1x128xf32, #tpu.memory_space<vmem>>, vector<1x128xf32>
    %26 = vector.broadcast %25 : vector<1x128xf32> to vector<8x128xf32>
    %27 = arith.addf %24, %26 : vector<8x128xf32>
    %c0_13 = arith.constant 0 : index
    %c0_14 = arith.constant 0 : index
    %28 = vector.load %arg6[%c0_13, %c0_14] : memref<8x128xf32, #tpu.memory_space<vmem>>, vector<8x128xf32>
    tpu.vector_store %arg6[%c0_13, %c0_14], %27 {strides = array<i32>} : memref<8x128xf32, #tpu.memory_space<vmem>>, vector<8x128xf32>,
    return
  }
  func.func @transform_0(%arg0: i32) -> (i32, i32) {
    %c0_i32 = arith.constant 0 : i32
    %c0_i32_0 = arith.constant 0 : i32
    return %arg0, %c0_i32 : i32, i32
  }
  func.func @transform_1(%arg0: i32) -> (i32, i32) {
    %c0_i32 = arith.constant 0 : i32
    %c0_i32_0 = arith.constant 0 : i32
    %c0_i32_1 = arith.constant 0 : i32
    return %c0_i32, %c0_i32_0 : i32, i32
  }
  func.func @transform_2(%arg0: i32) -> (i32, i32) {
    %c0_i32 = arith.constant 0 : i32
    %c0_i32_0 = arith.constant 0 : i32
    %c0_i32_1 = arith.constant 0 : i32
    return %c0_i32, %c0_i32_0 : i32, i32
  }
  func.func @transform_3(%arg0: i32) -> (i32, i32) {
    %c0_i32 = arith.constant 0 : i32
    %c0_i32_0 = arith.constant 0 : i32
    %c0_i32_1 = arith.constant 0 : i32
    return %c0_i32, %c0_i32_0 : i32, i32
  }
  func.func @transform_4(%arg0: i32) -> (i32, i32) {
    %c0_i32 = arith.constant 0 : i32
    %c0_i32_0 = arith.constant 0 : i32
    %c0_i32_1 = arith.constant 0 : i32
    return %c0_i32, %c0_i32_0 : i32, i32
  }
  func.func @transform_5(%arg0: i32) -> (i32, i32) {
    %c0_i32 = arith.constant 0 : i32
    %c0_i32_0 = arith.constant 0 : i32
    return %arg0, %c0_i32 : i32, i32
  }
}

</mosaic_0001>

<llo_original>
// kernel: _forward.1
$region0: #{_forward.1}
  #allocation0 [shape = 'u32[]', space=smem, size = 0x4, offset = 0x4, fixed_abs, tag = 'smem constant byte address 0x4 - core index']
  #allocation1 [shape = 'u32[144,128]{1,0:T(1,128)}', space=vmem, size = 0x12000, scoped, tag = 'internal scratch']
  %s0 = inlined_call_operand.hbm [shape: f32[8,13], index: 0, kind: input, shape index: {}]
  %s1 = inlined_call_operand.hbm [shape: f32[13,128], index: 1, kind: input, shape index: {}]
  %s2 = inlined_call_operand.vmem [shape: f32[1,128], index: 2, kind: input, shape index: {}]
  %s3 = inlined_call_operand.hbm [shape: f32[128,128], index: 3, kind: input, shape index: {}]
  %s4 = inlined_call_operand.vmem [shape: f32[1,128], index: 4, kind: input, shape index: {}]
  %s5 = inlined_call_operand.vmem [shape: f32[8,128], index: 5, kind: output, shape index: {}]
  %s6 = sld [smem:[#allocation0]]
  $region42: #{_forward.1} parent=0
    _
  %s8 = ssub.s32 1, %s6
  %s9 = scalar_select 0, %s8, %s6
  $region1: #{_forward.1} parent=0
    #allocation2 [shape = 'u8[4096]{0}', space=vmem, size = 0x1000, scoped, tag = 'input window, operand 0, single buffered']
    #allocation3 [shape = 's32[1]{0}', space=sflag, size = 0x4, scoped, tag = 'scoped memory for _forward.1']
    #allocation4 [shape = 'u8[8192]{0}', space=vmem, size = 0x2000, scoped, tag = 'input window, operand 1, single buffered']
    #allocation5 [shape = 's32[1]{0}', space=sflag, size = 0x4, scoped, tag = 'scoped memory for _forward.1']
    #allocation6 [shape = 'u8[65536]{0}', space=vmem, size = 0x10000, scoped, tag = 'input window, operand 3, single buffered']
    %10 = vsyncpa [#allocation3], 0
    %11 = vsyncpa [#allocation5], 0
    // Predicated region
    $region2: #{_forward.1} parent=1 // pred_check
      _
    $region3: #{_forward.1} parent=1 // pred_check_branch
      %13 = sbr.rel (0) target = $region5
    $region4: #{_forward.1} parent=1 // pred_region
      %s15 = ssub.s32 128, 128
      %16 = vsyncadd [#allocation3], %s15
      %s18 = sshll.u32 [#allocation2], 4
      %s19 = int_to_ptr.vmem [resolvable:$true] %s18
      %21 = dma.hbm_to_vmem [thread:$0]  %s0, 128, %s19, [#allocation3]
    $region5: #{_forward.1} parent=1 // pred_fallthru
      _
    // Predicated region
    $region6: #{_forward.1} parent=1 // pred_check
      _
    $region7: #{_forward.1} parent=1 // pred_check_branch
      %23 = sbr.rel (0) target = $region9
    $region8: #{_forward.1} parent=1 // pred_region
      %s25 = ssub.s32 256, 256
      %26 = vsyncadd [#allocation5], %s25
      %s27 = sshll.u32 [#allocation4], 4
      %s28 = int_to_ptr.vmem [resolvable:$true] %s27
      %33 = dma.hbm_to_vmem [thread:$0]  %s1, 256, %s28, [#allocation5], 128, 128, 8
    $region9: #{_forward.1} parent=1 // pred_fallthru
      _
    // Predicated region
    $region10: #{_forward.1} parent=1 // pred_check
      _
    $region11: #{_forward.1} parent=1 // pred_check_branch
      %35 = sbr.rel (0) target = $region13
    $region12: #{_forward.1} parent=1 // pred_region
      _
    $region13: #{_forward.1} parent=1 // pred_fallthru
      _
    // Predicated region
    $region14: #{_forward.1} parent=1 // pred_check
      _
    $region15: #{_forward.1} parent=1 // pred_check_branch
      %37 = sbr.rel (0) target = $region17
    $region16: #{_forward.1} parent=1 // pred_region
      %s39 = ssub.s32 2048, 2048
      %40 = vsyncadd [#allocation5], %s39
      %s41 = sshll.u32 [#allocation6], 4
      %s42 = int_to_ptr.vmem [resolvable:$true] %s41
      %47 = dma.hbm_to_vmem [thread:$0]  %s3, 2048, %s42, [#allocation5], 128, 128, 8
    $region17: #{_forward.1} parent=1 // pred_fallthru
      _
    // Predicated region
    $region18: #{_forward.1} parent=1 // pred_check
      _
    $region19: #{_forward.1} parent=1 // pred_check_branch
      %49 = sbr.rel (0) target = $region21
    $region20: #{_forward.1} parent=1 // pred_region
      _
    $region21: #{_forward.1} parent=1 // pred_fallthru
      _
    // Predicated region
    $region22: #{_forward.1} parent=1 // pred_check
      _
    $region23: #{_forward.1} parent=1 // pred_check_branch
      %51 = sbr.rel (0) target = $region25
    $region24: #{_forward.1} parent=1 // pred_region
      %52 = dma.done [#allocation3], 128
    $region25: #{_forward.1} parent=1 // pred_fallthru
      _
    // Predicated region
    $region26: #{_forward.1} parent=1 // pred_check
      _
    $region27: #{_forward.1} parent=1 // pred_check_branch
      %54 = sbr.rel (0) target = $region29
    $region28: #{_forward.1} parent=1 // pred_region
      %55 = dma.done [#allocation5], 256
    $region29: #{_forward.1} parent=1 // pred_fallthru
      _
    // Predicated region
    $region30: #{_forward.1} parent=1 // pred_check
      _
    $region31: #{_forward.1} parent=1 // pred_check_branch
      %57 = sbr.rel (0) target = $region33
    $region32: #{_forward.1} parent=1 // pred_region
      %58 = dma.done [#allocation5], 2048
    $region33: #{_forward.1} parent=1 // pred_fallthru
      _
    %v59 = vld [vmem:[#allocation2] sm:$0xff]
    %v60 = vld [vmem:[#allocation4] sm:$0xff]
    %v61 = vld [vmem:[#allocation4 + $0x8] sm:$0x1f]
    %v62 = vld [vmem:[#allocation6] sm:$0xff]
    %v63 = vld [vmem:[#allocation6 + $0x8] sm:$0xff]
    %v64 = vld [vmem:[#allocation6 + $0x10] sm:$0xff]
    %v65 = vld [vmem:[#allocation6 + $0x18] sm:$0xff]
    %v66 = vld [vmem:[#allocation6 + $0x20] sm:$0xff]
    %v67 = vld [vmem:[#allocation6 + $0x28] sm:$0xff]
    %v68 = vld [vmem:[#allocation6 + $0x30] sm:$0xff]
    %v69 = vld [vmem:[#allocation6 + $0x38] sm:$0xff]
    %v70 = vld [vmem:[#allocation6 + $0x40] sm:$0xff]
    %v71 = vld [vmem:[#allocation6 + $0x48] sm:$0xff]
    %v72 = vld [vmem:[#allocation6 + $0x50] sm:$0xff]
    %v73 = vld [vmem:[#allocation6 + $0x58] sm:$0xff]
    %v74 = vld [vmem:[#allocation6 + $0x60] sm:$0xff]
    %v75 = vld [vmem:[#allocation6 + $0x68] sm:$0xff]
    %v76 = vld [vmem:[#allocation6 + $0x70] sm:$0xff]
    %v77 = vld [vmem:[#allocation6 + $0x78] sm:$0xff]
    %v78 = vld [vmem:[%s2] sm:$0x1]
    %v80 = vlaneseq
    %v81 = vshrl.u32 %v80, 7
    %v82 = vsub.s32 0, %v81
    %v83 = vrot.slane %v78, %v82
    %vm85 = vcmask 105472
    %v87 = vsel %vm85, %v59, 0
    %vm89 = vcmask 1044480
    %v91 = vsel %vm89, %v61, 0
    %93 = vmatprep.subr.mxu0 0.0
    %94 = vmatpush1.msra.mxu0 %v60
    %95 = vmatprep.subr.mxu0 0.0
    %96 = vmatpush1.msra.mxu0 %v91
    %97 = vmatprep.subr.mxu0 0.0
    %98 = vmatpush1.msra.mxu0 0.0
    %99 = vmatprep.subr.mxu0 0.0
    %100 = vmatpush1.msra.mxu0 0.0
    %101 = vmatprep.subr.mxu0 0.0
    %102 = vmatpush1.msra.mxu0 0.0
    %103 = vmatprep.subr.mxu0 0.0
    %104 = vmatpush1.msra.mxu0 0.0
    %105 = vmatprep.subr.mxu0 0.0
    %106 = vmatpush1.msra.mxu0 0.0
    %107 = vmatprep.subr.mxu0 0.0
    %108 = vmatpush1.msra.mxu0 0.0
    %109 = vmatprep.subr.mxu0 0.0
    %110 = vmatpush1.msra.mxu0 0.0
    %111 = vmatprep.subr.mxu0 0.0
    %112 = vmatpush1.msra.mxu0 0.0
    %113 = vmatprep.subr.mxu0 0.0
    %114 = vmatpush1.msra.mxu0 0.0
    %115 = vmatprep.subr.mxu0 0.0
    %116 = vmatpush1.msra.mxu0 0.0
    %117 = vmatprep.subr.mxu0 0.0
    %118 = vmatpush1.msra.mxu0 0.0
    %119 = vmatprep.subr.mxu0 0.0
    %120 = vmatpush1.msra.mxu0 0.0
    %121 = vmatprep.subr.mxu0 0.0
    %122 = vmatpush1.msra.mxu0 0.0
    %123 = vmatprep.subr.mxu0 0.0
    %124 = vmatpush1.msra.mxu0 0.0
    %125 = vmatprep.subr.mxu0 0.0
    %126 = vmatpush1.msra.mxu0 0.0
    %127 = vmatprep.subr.mxu0 0.0
    %128 = vmatpush1.msra.mxu0 0.0
    %129 = vmatprep.subr.mxu0 0.0
    %130 = vmatpush1.msra.mxu0 0.0
    %131 = vmatprep.subr.mxu0 0.0
    %132 = vmatpush1.msra.mxu0 0.0
    %133 = vmatprep.subr.mxu0 0.0
    %134 = vmatpush1.msra.mxu0 0.0
    %135 = vmatprep.subr.mxu0 0.0
    %136 = vmatpush1.msra.mxu0 0.0
    %137 = vmatprep.subr.mxu0 0.0
    %138 = vmatpush1.msra.mxu0 0.0
    %139 = vmatprep.subr.mxu0 0.0
    %140 = vmatpush1.msra.mxu0 0.0
    %141 = vmatprep.subr.mxu0 0.0
    %142 = vmatpush1.msra.mxu0 0.0
    %143 = vmatprep.subr.mxu0 0.0
    %144 = vmatpush1.msra.mxu0 0.0
    %145 = vmatprep.subr.mxu0 0.0
    %146 = vmatpush1.msra.mxu0 0.0
    %147 = vmatprep.subr.mxu0 0.0
    %148 = vmatpush1.msra.mxu0 0.0
    %149 = vmatprep.subr.mxu0 0.0
    %150 = vmatpush1.msra.mxu0 0.0
    %151 = vmatprep.subr.mxu0 0.0
    %152 = vmatpush1.msra.mxu0 0.0
    %153 = vmatprep.subr.mxu0 0.0
    %154 = vmatpush1.msra.mxu0 0.0
    %155 = vmatprep.subr.mxu0 0.0
    %156 = vmatpush1.msra.mxu0 0.0
    %157 = vmatprep.mubr.f32.mxu0 0.0
    %158 = vmatmul.mubr.f32.gmra.mrb[0].mxu0 %v87
    %v159 = vpop.f32.mrb[0].mxu0
    %v160 = vadd.f32 %v83, %v159
    %v161 = vpop.f32.mrb[0].mxu0
    %162 = vdwg.mxu0
    %v163 = vmax.f32 %v160, 0.0
    %164 = vmatprep.subr.mxu0 0.0
    %165 = vmatpush1.msra.mxu0 %v62
    %166 = vmatprep.subr.mxu0 0.0
    %167 = vmatpush1.msra.mxu0 %v63
    %168 = vmatprep.subr.mxu0 0.0
    %169 = vmatpush1.msra.mxu0 %v64
    %170 = vmatprep.subr.mxu0 0.0
    %171 = vmatpush1.msra.mxu0 %v65
    %172 = vmatprep.subr.mxu0 0.0
    %173 = vmatpush1.msra.mxu0 %v66
    %174 = vmatprep.subr.mxu0 0.0
    %175 = vmatpush1.msra.mxu0 %v67
    %176 = vmatprep.subr.mxu0 0.0
    %177 = vmatpush1.msra.mxu0 %v68
    %178 = vmatprep.subr.mxu0 0.0
    %179 = vmatpush1.msra.mxu0 %v69
    %180 = vmatprep.subr.mxu0 0.0
    %181 = vmatpush1.msra.mxu0 %v70
    %182 = vmatprep.subr.mxu0 0.0
    %183 = vmatpush1.msra.mxu0 %v71
    %184 = vmatprep.subr.mxu0 0.0
    %185 = vmatpush1.msra.mxu0 %v72
    %186 = vmatprep.subr.mxu0 0.0
    %187 = vmatpush1.msra.mxu0 %v73
    %188 = vmatprep.subr.mxu0 0.0
    %189 = vmatpush1.msra.mxu0 %v74
    %190 = vmatprep.subr.mxu0 0.0
    %191 = vmatpush1.msra.mxu0 %v75
    %192 = vmatprep.subr.mxu0 0.0
    %193 = vmatpush1.msra.mxu0 %v76
    %194 = vmatprep.subr.mxu0 0.0
    %195 = vmatpush1.msra.mxu0 %v77
    %196 = vmatprep.subr.mxu0 0.0
    %197 = vmatpush1.msra.mxu0 0.0
    %198 = vmatprep.subr.mxu0 0.0
    %199 = vmatpush1.msra.mxu0 0.0
    %200 = vmatprep.subr.mxu0 0.0
    %201 = vmatpush1.msra.mxu0 0.0
    %202 = vmatprep.subr.mxu0 0.0
    %203 = vmatpush1.msra.mxu0 0.0
    %204 = vmatprep.subr.mxu0 0.0
    %205 = vmatpush1.msra.mxu0 0.0
    %206 = vmatprep.subr.mxu0 0.0
    %207 = vmatpush1.msra.mxu0 0.0
    %208 = vmatprep.subr.mxu0 0.0
    %209 = vmatpush1.msra.mxu0 0.0
    %210 = vmatprep.subr.mxu0 0.0
    %211 = vmatpush1.msra.mxu0 0.0
    %212 = vmatprep.subr.mxu0 0.0
    %213 = vmatpush1.msra.mxu0 0.0
    %214 = vmatprep.subr.mxu0 0.0
    %215 = vmatpush1.msra.mxu0 0.0
    %216 = vmatprep.subr.mxu0 0.0
    %217 = vmatpush1.msra.mxu0 0.0
    %218 = vmatprep.subr.mxu0 0.0
    %219 = vmatpush1.msra.mxu0 0.0
    %220 = vmatprep.subr.mxu0 0.0
    %221 = vmatpush1.msra.mxu0 0.0
    %222 = vmatprep.subr.mxu0 0.0
    %223 = vmatpush1.msra.mxu0 0.0
    %224 = vmatprep.subr.mxu0 0.0
    %225 = vmatpush1.msra.mxu0 0.0
    %226 = vmatprep.subr.mxu0 0.0
    %227 = vmatpush1.msra.mxu0 0.0
    %228 = vmatprep.mubr.f32.mxu0 0.0
    %229 = vmatmul.mubr.f32.gmra.mrb[0].mxu0 %v163
    %v230 = vpop.f32.mrb[0].mxu0
    %v231 = vadd.f32 0.0, %v230
    %v232 = vpop.f32.mrb[0].mxu0
    %233 = vdwg.mxu0
    %vm234 = vcmask 23568
    %v235 = vsel %vm234, %v231, -inf
    %v236 = vrot.slane %v235, 4
    %v237 = vmax.f32 %v235, %v236
    %v238 = vrot.slane %v237, 2
    %v239 = vmax.f32 %v237, %v238
    %v240 = vrot.slane %v239, 1
    %v241 = vmax.f32 %v239, %v240
    %v242 = vsub.f32 %v231, %v241
    %v243 = vmul.f32 %v242, 1.442695
    %v244 = vpow.pop %v243
    %v245 = vsel %vm234, %v244, 0.0
    %v246 = vrot.slane %v245, 4
    %v247 = vadd.f32 %v245, %v246
    %v248 = vrot.slane %v247, 2
    %v249 = vadd.f32 %v247, %v248
    %v250 = vrot.slane %v249, 1
    %v251 = vadd.f32 %v249, %v250
    %v252 = vrcp.pop %v251
    %v253 = vmul.f32 %v244, %v252
    %255 = vset.pattern.permute.xlu0 2
    %256 = vperm.xlu0 %255, %v253
    %v257 = vpop.permute.xlu0 %256
    %v259 = vmul.f32 %v257, %v231
    %v260 = vld [vmem:[%s4] sm:$0x1]
    %v262 = vlaneseq
    %v263 = vshrl.u32 %v262, 7
    %v264 = vsub.s32 0, %v263
    %v265 = vrot.slane %v260, %v264
    %v267 = vadd.f32 %v259, %v265
    %268 = vst [vmem:[%s5] sm:$0xff] %v267
    // Predicated region
    $region34: #{_forward.1} parent=1 // pred_check
      _
    $region35: #{_forward.1} parent=1 // pred_check_branch
      %270 = sbr.rel (0) target = $region37
    $region36: #{_forward.1} parent=1 // pred_region
      _
    $region37: #{_forward.1} parent=1 // pred_fallthru
      _
    // Predicated region
    $region38: #{_forward.1} parent=1 // pred_check
      _
    $region39: #{_forward.1} parent=1 // pred_check_branch
      %272 = sbr.rel (0) target = $region41
    $region40: #{_forward.1} parent=1 // pred_region
      _
    $region41: #{_forward.1} parent=1 // pred_fallthru
      _
    %273 = vsyncpa [#allocation3], 1
    %274 = vsyncpa [#allocation5], 1

</llo_original>
